<compile_context>
chip_gen: v7x
topology: tpu7x:2x2x1
jax: 0.10.0
libtpu: 0.0.40
codegen_flags: <defaults>
</compile_context>

<pallas_src>
import jax
import jax.numpy as jnp
from jax.experimental import pallas as pl
from jax.experimental.pallas import tpu as pltpu


def _cdiv(a, b):
    return -(-a // b)


def _round_up(x, m):
    return _cdiv(x, m) * m


def fcqv_kernel(s_ref, u_ref, w1_ref, b1_ref, w2x_ref, w2u_ref, b2_ref,
                w3_ref, b3_ref, o_ref):
    """One batch tile. Batch rides the lanes: activations are (features, TM)."""
    # Layer 1: x = relu(W1 @ s + b1)                         -> (H1, TM)
    x = jnp.dot(w1_ref[...], s_ref[...], preferred_element_type=jnp.float32)
    x = jnp.maximum(x + b1_ref[...], 0.0)

    # Layer 2: h = relu(W2x @ x + W2u @ u + b2)              -> (H2, TM)
    #   == relu(W2 @ cat([x, u]) + b2)   with   W2 = [W2x | W2u]
    h = jnp.dot(w2x_ref[...], x.astype(w2x_ref.dtype),
                preferred_element_type=jnp.float32)
    h = h + jnp.dot(w2u_ref[...], u_ref[...],
                    preferred_element_type=jnp.float32)
    h = jnp.maximum(h + b2_ref[...], 0.0)

    # Output layer: q = W3 @ h + b3                          -> (1, TM) lane-dense
    q = jnp.dot(w3_ref[...], h.astype(w3_ref.dtype),
                preferred_element_type=jnp.float32)
    o_ref[...] = q + b3_ref[...]


def _choose_tile(batch, block_batch):
    """Batch tile (multiple of 128 lanes), tied to B, >=2 grid steps if B>128."""
    cap = max(128, _round_up(min(block_batch, max(batch, 1)), 128))
    steps = _cdiv(batch, cap)
    if batch > 128:
        steps = max(steps, 2)      # v7x megacore: shard the batch over both TCs
    steps = max(steps, 1)
    tm = min(cap, max(128, _round_up(_cdiv(batch, steps), 128)))
    return tm, _cdiv(batch, tm)


def fcqv_forward(state, action, params, *, block_batch=32768,
                 compute_dtype=jnp.bfloat16, feature_major=False):
    """FCQV forward.

    state/action: (B, input_dim)/(B, output_dim) by default, or — with
    feature_major=True — already-transposed (input_dim, B)/(output_dim, B)
    arrays which are streamed with zero wrapper copies.  Returns (B, 1) f32.
    """
    w1, b1, w2x, w2u, b2, w3, b3 = params
    h1, in_dim = w1.shape
    h2, act_dim = w2u.shape
    cd = compute_dtype

    if feature_major:
        assert state.shape[0] == in_dim and action.shape[0] == act_dim
        B = state.shape[1]
        s_t, u_t = state, action           # zero-copy streaming path
    else:
        B = state.shape[0]

    tm, grid_b = _choose_tile(B, block_batch)
    b_pad = grid_b * tm

    if not feature_major:
        # One fused transpose + cast + pad per input, at compute_dtype (half
        # width by default).  This is the only staging copy and it disappears
        # entirely when the caller supplies feature-major inputs above.
        s_t = jnp.pad(state.T.astype(cd), ((0, 0), (0, b_pad - B)))
        u_t = jnp.pad(action.T.astype(cd), ((0, 0), (0, b_pad - B)))
    # else: if B % tm != 0 the last input block is clipped by the pipeline;
    # stale lanes >= B only affect their own (independent) batch columns of the
    # padded output, which are sliced off below.

    const = lambda i: (0, 0)   # weights / biases: VMEM-resident across the grid
    out = pl.pallas_call(
        fcqv_kernel,
        out_shape=jax.ShapeDtypeStruct((1, b_pad), jnp.float32),
        grid=(grid_b,),
        in_specs=[
            pl.BlockSpec((in_dim, tm), lambda i: (0, i)),    # state^T tile
            pl.BlockSpec((act_dim, tm), lambda i: (0, i)),   # action^T tile
            pl.BlockSpec((h1, in_dim), const),               # W1
            pl.BlockSpec((h1, 1), const),                    # b1
            pl.BlockSpec((h2, h1), const),                   # W2x
            pl.BlockSpec((h2, act_dim), const),              # W2u
            pl.BlockSpec((h2, 1), const),                    # b2
            pl.BlockSpec((1, h2), const),                    # W3
            pl.BlockSpec((1, 1), const),                     # b3
        ],
        out_specs=pl.BlockSpec((1, tm), lambda i: (0, i)),
        compiler_params=pltpu.CompilerParams(
            dimension_semantics=("parallel",),               # v7x megacore
            vmem_limit_bytes=40 * 1024 * 1024),
    )(s_t, u_t, w1.astype(cd), b1, w2x.astype(cd), w2u.astype(cd), b2,
      w3.astype(cd), b3)

    return out[:, :B].T   # (B, 1) float32


def init_fcqv_params(key, input_dim, output_dim, hidden_dims=(32, 32)):
    """nn.Linear-style init: U(-1/sqrt(fan_in), +1/sqrt(fan_in)).

    Weights kept in PyTorch (out_features, in_features) layout; biases stored
    as (out_features, 1) columns so they broadcast over the lane (batch)
    dimension inside the kernel.  W2 is split into its x-part / u-part.
    """
    h1, h2 = hidden_dims
    ks = jax.random.split(key, 6)

    def lin(kw, kb, fan_in, fan_out):
        bound = 1.0 / jnp.sqrt(jnp.float32(fan_in))
        w = jax.random.uniform(kw, (fan_out, fan_in), jnp.float32, -bound, bound)
        b = jax.random.uniform(kb, (fan_out, 1), jnp.float32, -bound, bound)
        return w, b

    w1, b1 = lin(ks[0], ks[1], input_dim, h1)                 # (h1, input_dim)
    w2, b2 = lin(ks[2], ks[3], h1 + output_dim, h2)           # (h2, h1 + out)
    w3, b3 = lin(ks[4], ks[5], h2, 1)                         # (1, h2)

    w2x = w2[:, :h1]       # (h2, h1)         acts on relu(layer-1) slice of cat
    w2u = w2[:, h1:]       # (h2, output_dim) acts on the action slice of cat
    return (w1, b1, w2x, w2u, b2, w3, b3)


def fcqv_reference(state, action, params):
    w1, b1, w2x, w2u, b2, w3, b3 = params
    x = jax.nn.relu(state @ w1.T + b1[:, 0])
    h = jax.nn.relu(x @ w2x.T + action @ w2u.T + b2[:, 0])
    return h @ w3.T + b3[:, 0]


if __name__ == "__main__":
    input_dim = 16    # state dimension
    output_dim = 4    # action dimension
    hidden_dims = (32, 32)

    key = jax.random.PRNGKey(0)
    k_state, k_action, k_params = jax.random.split(key, 3)
    params = init_fcqv_params(k_params, input_dim, output_dim, hidden_dims)

    # 1) Small module-sized batch, f32 compute, tight check.
    batch = 2
    state = jax.random.normal(k_state, (batch, input_dim), jnp.float32)
    action = jax.random.normal(k_action, (batch, output_dim), jnp.float32)
    q = fcqv_forward(state, action, params, compute_dtype=jnp.float32)
    jax.block_until_ready(q)
    q_ref = fcqv_reference(state, action, params)
    assert q.shape == (batch, 1)
    assert jnp.allclose(q, q_ref, atol=1e-5, rtol=1e-5)

    # 2) Multi-step grid (3 tiles of 128) + batch-padding path, f32 compute.
    batch2 = 300
    k_s2, k_a2 = jax.random.split(k_state)
    state2 = jax.random.normal(k_s2, (batch2, input_dim), jnp.float32)
    action2 = jax.random.normal(k_a2, (batch2, output_dim), jnp.float32)
    q2 = fcqv_forward(state2, action2, params, block_batch=128,
                      compute_dtype=jnp.float32)
    jax.block_until_ready(q2)
    q2_ref = fcqv_reference(state2, action2, params)
    assert q2.shape == (batch2, 1)
    assert jnp.allclose(q2, q2_ref, atol=1e-5, rtol=1e-5)

    # 3) Default path: bf16 MXU streaming, f32 accumulation / bias / ReLU.
    q2_bf16 = fcqv_forward(state2, action2, params)
    jax.block_until_ready(q2_bf16)
    assert jnp.allclose(q2_bf16, q2_ref, atol=5e-2, rtol=5e-2)

    # 4) Zero-copy fast path: the data pipeline hands the kernel (features, B)
    #    bf16 arrays directly — no wrapper transpose / pad / cast at all.
    batch3 = 512
    k_s3, k_a3 = jax.random.split(k_action)
    state3_t = jax.random.normal(
        k_s3, (input_dim, batch3), jnp.float32).astype(jnp.bfloat16)
    action3_t = jax.random.normal(
        k_a3, (output_dim, batch3), jnp.float32).astype(jnp.bfloat16)
    q3 = fcqv_forward(state3_t, action3_t, params, feature_major=True)
    jax.block_until_ready(q3)
    q3_ref = fcqv_reference(state3_t.T.astype(jnp.float32),
                            action3_t.T.astype(jnp.float32), params)
    assert q3.shape == (batch3, 1)
    assert jnp.allclose(q3, q3_ref, atol=5e-2, rtol=5e-2)

    print("KERNEL_OK")
</pallas_src>

<mosaic_0001>
module attributes {stable_mosaic.version = 11 : i64} {
  func.func @fcqv_kernel(%arg0: i32, %arg1: memref<16x128xf32, #tpu.memory_space<vmem>>, %arg2: memref<4x128xf32, #tpu.memory_space<vmem>>, %arg3: memref<32x16xf32, #tpu.memory_space<vmem>>, %arg4: memref<32x1xf32, #tpu.memory_space<vmem>>, %arg5: memref<32x32xf32, #tpu.memory_space<vmem>>, %arg6: memref<32x4xf32, #tpu.memory_space<vmem>>, %arg7: memref<32x1xf32, #tpu.memory_space<vmem>>, %arg8: memref<1x32xf32, #tpu.memory_space<vmem>>, %arg9: memref<1x1xf32, #tpu.memory_space<vmem>>, %arg10: memref<1x128xf32, #tpu.memory_space<vmem>>) attributes {dimension_semantics = [#tpu.dimension_semantics<parallel>], iteration_bounds = array<i64: 1>, scalar_prefetch = 0 : i64, scratch_operands = 0 : i64, tpu.core_type = #tpu.core_type<tc>, window_params = [{transform_indices = @transform_0, window_bounds = array<i64: 16, 128>}, {transform_indices = @transform_1, window_bounds = array<i64: 4, 128>}, {pipeline_mode = #tpu.pipeline_mode<synchronous>, transform_indices = @transform_2, window_bounds = array<i64: 32, 16>}, {pipeline_mode = #tpu.pipeline_mode<synchronous>, transform_indices = @transform_3, window_bounds = array<i64: 32, 1>}, {pipeline_mode = #tpu.pipeline_mode<synchronous>, transform_indices = @transform_4, window_bounds = array<i64: 32, 32>}, {pipeline_mode = #tpu.pipeline_mode<synchronous>, transform_indices = @transform_5, window_bounds = array<i64: 32, 4>}, {pipeline_mode = #tpu.pipeline_mode<synchronous>, transform_indices = @transform_6, window_bounds = array<i64: 32, 1>}, {pipeline_mode = #tpu.pipeline_mode<synchronous>, transform_indices = @transform_7, window_bounds = array<i64: 1, 32>}, {pipeline_mode = #tpu.pipeline_mode<synchronous>, transform_indices = @transform_8, window_bounds = array<i64: 1, 1>}, {transform_indices = @transform_9, window_bounds = array<i64: 1, 128>}]} {
    %c0 = arith.constant 0 : index
    %c0_0 = arith.constant 0 : index
    %0 = vector.load %arg3[%c0, %c0_0] : memref<32x16xf32, #tpu.memory_space<vmem>>, vector<32x16xf32>
    %c0_1 = arith.constant 0 : index
    %c0_2 = arith.constant 0 : index
    %1 = vector.load %arg1[%c0_1, %c0_2] : memref<16x128xf32, #tpu.memory_space<vmem>>, vector<16x128xf32>
    %cst = arith.constant dense<0.000000e+00> : vector<32x128xf32>
    %2 = tpu.matmul %0, %1, %cst {dimension_numbers = #tpu.dot_dimension_numbers<[1], [0], [0], [1], [0, 0, 1, 1], [], []>} : vector<32x16xf32>, vector<16x128xf32>, vector<32x128xf32> -> vector<32x128xf32>
    %c0_3 = arith.constant 0 : index
    %c0_4 = arith.constant 0 : index
    %3 = vector.load %arg4[%c0_3, %c0_4] : memref<32x1xf32, #tpu.memory_space<vmem>>, vector<32x1xf32>
    %4 = vector.broadcast %3 : vector<32x1xf32> to vector<32x128xf32>
    %5 = arith.addf %2, %4 : vector<32x128xf32>
    %cst_5 = arith.constant 0.000000e+00 : f32
    %6 = vector.broadcast %cst_5 : f32 to vector<32x128xf32>
    %7 = arith.maximumf %5, %6 : vector<32x128xf32>
    %c0_6 = arith.constant 0 : index
    %c0_7 = arith.constant 0 : index
    %8 = vector.load %arg5[%c0_6, %c0_7] : memref<32x32xf32, #tpu.memory_space<vmem>>, vector<32x32xf32>
    %cst_8 = arith.constant dense<0.000000e+00> : vector<32x128xf32>
    %9 = tpu.matmul %8, %7, %cst_8 {dimension_numbers = #tpu.dot_dimension_numbers<[1], [0], [0], [1], [0, 0, 1, 1], [], []>} : vector<32x32xf32>, vector<32x128xf32>, vector<32x128xf32> -> vector<32x128xf32>
    %c0_9 = arith.constant 0 : index
    %c0_10 = arith.constant 0 : index
    %10 = vector.load %arg6[%c0_9, %c0_10] : memref<32x4xf32, #tpu.memory_space<vmem>>, vector<32x4xf32>
    %c0_11 = arith.constant 0 : index
    %c0_12 = arith.constant 0 : index
    %11 = vector.load %arg2[%c0_11, %c0_12] : memref<4x128xf32, #tpu.memory_space<vmem>>, vector<4x128xf32>
    %cst_13 = arith.constant dense<0.000000e+00> : vector<32x128xf32>
    %12 = tpu.matmul %10, %11, %cst_13 {dimension_numbers = #tpu.dot_dimension_numbers<[1], [0], [0], [1], [0, 0, 1, 1], [], []>} : vector<32x4xf32>, vector<4x128xf32>, vector<32x128xf32> -> vector<32x128xf32>
    %13 = arith.addf %9, %12 : vector<32x128xf32>
    %c0_14 = arith.constant 0 : index
    %c0_15 = arith.constant 0 : index
    %14 = vector.load %arg7[%c0_14, %c0_15] : memref<32x1xf32, #tpu.memory_space<vmem>>, vector<32x1xf32>
    %15 = vector.broadcast %14 : vector<32x1xf32> to vector<32x128xf32>
    %16 = arith.addf %13, %15 : vector<32x128xf32>
    %cst_16 = arith.constant 0.000000e+00 : f32
    %17 = vector.broadcast %cst_16 : f32 to vector<32x128xf32>
    %18 = arith.maximumf %16, %17 : vector<32x128xf32>
    %c0_17 = arith.constant 0 : index
    %c0_18 = arith.constant 0 : index
    %19 = vector.load %arg8[%c0_17, %c0_18] : memref<1x32xf32, #tpu.memory_space<vmem>>, vector<1x32xf32>
    %cst_19 = arith.constant dense<0.000000e+00> : vector<1x128xf32>
    %20 = tpu.matmul %19, %18, %cst_19 {dimension_numbers = #tpu.dot_dimension_numbers<[1], [0], [0], [1], [0, 0, 1, 1], [], []>} : vector<1x32xf32>, vector<32x128xf32>, vector<1x128xf32> -> vector<1x128xf32>
    %c0_20 = arith.constant 0 : index
    %c0_21 = arith.constant 0 : index
    %21 = vector.load %arg9[%c0_20, %c0_21] : memref<1x1xf32, #tpu.memory_space<vmem>>, vector<1x1xf32>
    %22 = vector.broadcast %21 : vector<1x1xf32> to vector<1x128xf32>
    %23 = arith.addf %20, %22 : vector<1x128xf32>
    %c0_22 = arith.constant 0 : index
    %c0_23 = arith.constant 0 : index
    %24 = vector.load %arg10[%c0_22, %c0_23] : memref<1x128xf32, #tpu.memory_space<vmem>>, vector<1x128xf32>
    tpu.vector_store %arg10[%c0_22, %c0_23], %23 {strides = array<i32>} : memref<1x128xf32, #tpu.memory_space<vmem>>, vector<1x128xf32>,
    return
  }
  func.func @transform_0(%arg0: i32) -> (i32, i32) {
    %c0_i32 = arith.constant 0 : i32
    %c0_i32_0 = arith.constant 0 : i32
    return %c0_i32, %arg0 : i32, i32
  }
  func.func @transform_1(%arg0: i32) -> (i32, i32) {
    %c0_i32 = arith.constant 0 : i32
    %c0_i32_0 = arith.constant 0 : i32
    return %c0_i32, %arg0 : i32, i32
  }
  func.func @transform_2(%arg0: i32) -> (i32, i32) {
    %c0_i32 = arith.constant 0 : i32
    %c0_i32_0 = arith.constant 0 : i32
    %c0_i32_1 = arith.constant 0 : i32
    return %c0_i32, %c0_i32_0 : i32, i32
  }
  func.func @transform_3(%arg0: i32) -> (i32, i32) {
    %c0_i32 = arith.constant 0 : i32
    %c0_i32_0 = arith.constant 0 : i32
    %c0_i32_1 = arith.constant 0 : i32
    return %c0_i32, %c0_i32_0 : i32, i32
  }
  func.func @transform_4(%arg0: i32) -> (i32, i32) {
    %c0_i32 = arith.constant 0 : i32
    %c0_i32_0 = arith.constant 0 : i32
    %c0_i32_1 = arith.constant 0 : i32
    return %c0_i32, %c0_i32_0 : i32, i32
  }
  func.func @transform_5(%arg0: i32) -> (i32, i32) {
    %c0_i32 = arith.constant 0 : i32
    %c0_i32_0 = arith.constant 0 : i32
    %c0_i32_1 = arith.constant 0 : i32
    return %c0_i32, %c0_i32_0 : i32, i32
  }
  func.func @transform_6(%arg0: i32) -> (i32, i32) {
    %c0_i32 = arith.constant 0 : i32
    %c0_i32_0 = arith.constant 0 : i32
    %c0_i32_1 = arith.constant 0 : i32
    return %c0_i32, %c0_i32_0 : i32, i32
  }
  func.func @transform_7(%arg0: i32) -> (i32, i32) {
    %c0_i32 = arith.constant 0 : i32
    %c0_i32_0 = arith.constant 0 : i32
    %c0_i32_1 = arith.constant 0 : i32
    return %c0_i32, %c0_i32_0 : i32, i32
  }
  func.func @transform_8(%arg0: i32) -> (i32, i32) {
    %c0_i32 = arith.constant 0 : i32
    %c0_i32_0 = arith.constant 0 : i32
    %c0_i32_1 = arith.constant 0 : i32
    return %c0_i32, %c0_i32_0 : i32, i32
  }
  func.func @transform_9(%arg0: i32) -> (i32, i32) {
    %c0_i32 = arith.constant 0 : i32
    %c0_i32_0 = arith.constant 0 : i32
    return %c0_i32, %arg0 : i32, i32
  }
}

</mosaic_0001>

<llo_original>
// kernel: tpu_custom_call.1
$region0: #{tpu_custom_call.1}
  #allocation0 [shape = 'u32[]', space=smem, size = 0x4, offset = 0x4, fixed_abs, tag = 'smem constant byte address 0x4 - core index']
  #allocation1 [shape = 'u32[144,128]{1,0:T(1,128)}', space=vmem, size = 0x12000, scoped, tag = 'internal scratch']
  #allocation2 [shape = 'f32[1,1]{1,0:T(1,128)S(1)}', space=vmem, size = 0x200, scoped, tag = 'scoped memory for tpu_custom_call.1']
  %s0 = inlined_call_operand.vmem [shape: f32[16,128], index: 0, kind: input, shape index: {}]
  %s1 = inlined_call_operand.vmem [shape: f32[4,128], index: 1, kind: input, shape index: {}]
  %s2 = inlined_call_operand.vmem [shape: f32[32,16], index: 2, kind: input, shape index: {}]
  %s3 = inlined_call_operand.vmem [shape: f32[32,1], index: 3, kind: input, shape index: {}]
  %s4 = inlined_call_operand.vmem [shape: f32[32,32], index: 4, kind: input, shape index: {}]
  %s5 = inlined_call_operand.vmem [shape: f32[32,4], index: 5, kind: input, shape index: {}]
  %s6 = inlined_call_operand.vmem [shape: f32[32,1], index: 6, kind: input, shape index: {}]
  %s7 = inlined_call_operand.vmem [shape: f32[1,32], index: 7, kind: input, shape index: {}]
  %s8 = inlined_call_operand.<no memory space> [shape: f32[1,1], index: 8, kind: input, shape index: {}]
  %s9 = inlined_call_operand.hbm [shape: f32[1,128], index: 9, kind: output, shape index: {}]
  %s10 = sld [smem:[#allocation0]]
  $region46: #{tpu_custom_call.1} parent=0
    _
  %s12 = ssub.s32 1, %s10
  %s13 = scalar_select 0, %s12, %s10
  %v14 = vstv %s8
  %15 = vst [vmem:[#allocation2] sm:$0x1] %v14
  $region1: #{tpu_custom_call.1} parent=0
    #allocation3 [shape = 'u8[512]{0}', space=vmem, size = 0x400, scoped, tag = 'output window, operand 0, single buffered']
    #allocation4 [shape = 's32[1]{0}', space=sflag, size = 0x4, scoped, tag = 'scoped memory for tpu_custom_call.1']
    %16 = vsyncpa [#allocation4], 0
    // Predicated region
    $region2: #{tpu_custom_call.1} parent=1 // pred_check
      _
    $region3: #{tpu_custom_call.1} parent=1 // pred_check_branch
      %18 = sbr.rel (0) target = $region5
    $region4: #{tpu_custom_call.1} parent=1 // pred_region
      _
    $region5: #{tpu_custom_call.1} parent=1 // pred_fallthru
      _
    // Predicated region
    $region6: #{tpu_custom_call.1} parent=1 // pred_check
      _
    $region7: #{tpu_custom_call.1} parent=1 // pred_check_branch
      %20 = sbr.rel (0) target = $region9
    $region8: #{tpu_custom_call.1} parent=1 // pred_region
      _
    $region9: #{tpu_custom_call.1} parent=1 // pred_fallthru
      _
    // Predicated region
    $region10: #{tpu_custom_call.1} parent=1 // pred_check
      _
    $region11: #{tpu_custom_call.1} parent=1 // pred_check_branch
      %22 = sbr.rel (0) target = $region13
    $region12: #{tpu_custom_call.1} parent=1 // pred_region
      _
    $region13: #{tpu_custom_call.1} parent=1 // pred_fallthru
      _
    // Predicated region
    $region14: #{tpu_custom_call.1} parent=1 // pred_check
      _
    $region15: #{tpu_custom_call.1} parent=1 // pred_check_branch
      %24 = sbr.rel (0) target = $region17
    $region16: #{tpu_custom_call.1} parent=1 // pred_region
      _
    $region17: #{tpu_custom_call.1} parent=1 // pred_fallthru
      _
    // Predicated region
    $region18: #{tpu_custom_call.1} parent=1 // pred_check
      _
    $region19: #{tpu_custom_call.1} parent=1 // pred_check_branch
      %26 = sbr.rel (0) target = $region21
    $region20: #{tpu_custom_call.1} parent=1 // pred_region
      _
    $region21: #{tpu_custom_call.1} parent=1 // pred_fallthru
      _
    // Predicated region
    $region22: #{tpu_custom_call.1} parent=1 // pred_check
      _
    $region23: #{tpu_custom_call.1} parent=1 // pred_check_branch
      %28 = sbr.rel (0) target = $region25
    $region24: #{tpu_custom_call.1} parent=1 // pred_region
      _
    $region25: #{tpu_custom_call.1} parent=1 // pred_fallthru
      _
    // Predicated region
    $region26: #{tpu_custom_call.1} parent=1 // pred_check
      _
    $region27: #{tpu_custom_call.1} parent=1 // pred_check_branch
      %30 = sbr.rel (0) target = $region29
    $region28: #{tpu_custom_call.1} parent=1 // pred_region
      _
    $region29: #{tpu_custom_call.1} parent=1 // pred_fallthru
      _
    // Predicated region
    $region30: #{tpu_custom_call.1} parent=1 // pred_check
      _
    $region31: #{tpu_custom_call.1} parent=1 // pred_check_branch
      %32 = sbr.rel (0) target = $region33
    $region32: #{tpu_custom_call.1} parent=1 // pred_region
      _
    $region33: #{tpu_custom_call.1} parent=1 // pred_fallthru
      _
    // Predicated region
    $region34: #{tpu_custom_call.1} parent=1 // pred_check
      _
    $region35: #{tpu_custom_call.1} parent=1 // pred_check_branch
      %34 = sbr.rel (0) target = $region37
    $region36: #{tpu_custom_call.1} parent=1 // pred_region
      _
    $region37: #{tpu_custom_call.1} parent=1 // pred_fallthru
      _
    %v35 = vld [vmem:[%s2] sm:$0xff]
    %v36 = vld [vmem:[%s2 + $0x8] sm:$0xff]
    %v37 = vld [vmem:[%s2 + $0x10] sm:$0xff]
    %v38 = vld [vmem:[%s2 + $0x18] sm:$0xff]
    %v39 = vld [vmem:[%s0] sm:$0xff]
    %v40 = vld [vmem:[%s0 + $0x8] sm:$0xff]
    %v41 = vld [vmem:[%s3] sm:$0xff]
    %v42 = vld [vmem:[%s3 + $0x8] sm:$0xff]
    %v43 = vld [vmem:[%s3 + $0x10] sm:$0xff]
    %v44 = vld [vmem:[%s3 + $0x18] sm:$0xff]
    %46 = vset.pattern.permute.xlu0 0
    %47 = vperm.xlu0 %46, %v41
    %v48 = vpop.permute.xlu0 %47
    %51 = vset.pattern.permute.xlu0 0
    %52 = vperm.xlu0 %51, %v42
    %v53 = vpop.permute.xlu0 %52
    %56 = vset.pattern.permute.xlu0 0
    %57 = vperm.xlu0 %56, %v43
    %v58 = vpop.permute.xlu0 %57
    %61 = vset.pattern.permute.xlu0 0
    %62 = vperm.xlu0 %61, %v44
    %v63 = vpop.permute.xlu0 %62
    %vm65 = vcmask 130048
    %v67 = vsel %vm65, %v35, 0
    %v70 = vsel %vm65, %v36, 0
    %v73 = vsel %vm65, %v37, 0
    %v76 = vsel %vm65, %v38, 0
    %78 = vmatprep.subr.mxu0 0.0
    %79 = vmatpush1.msra.mxu0 %v39
    %80 = vmatprep.subr.mxu0 0.0
    %81 = vmatpush1.msra.mxu0 %v40
    %82 = vmatprep.subr.mxu0 0.0
    %83 = vmatpush1.msra.mxu0 0.0
    %84 = vmatprep.subr.mxu0 0.0
    %85 = vmatpush1.msra.mxu0 0.0
    %86 = vmatprep.subr.mxu0 0.0
    %87 = vmatpush1.msra.mxu0 0.0
    %88 = vmatprep.subr.mxu0 0.0
    %89 = vmatpush1.msra.mxu0 0.0
    %90 = vmatprep.subr.mxu0 0.0
    %91 = vmatpush1.msra.mxu0 0.0
    %92 = vmatprep.subr.mxu0 0.0
    %93 = vmatpush1.msra.mxu0 0.0
    %94 = vmatprep.subr.mxu0 0.0
    %95 = vmatpush1.msra.mxu0 0.0
    %96 = vmatprep.subr.mxu0 0.0
    %97 = vmatpush1.msra.mxu0 0.0
    %98 = vmatprep.subr.mxu0 0.0
    %99 = vmatpush1.msra.mxu0 0.0
    %100 = vmatprep.subr.mxu0 0.0
    %101 = vmatpush1.msra.mxu0 0.0
    %102 = vmatprep.subr.mxu0 0.0
    %103 = vmatpush1.msra.mxu0 0.0
    %104 = vmatprep.subr.mxu0 0.0
    %105 = vmatpush1.msra.mxu0 0.0
    %106 = vmatprep.subr.mxu0 0.0
    %107 = vmatpush1.msra.mxu0 0.0
    %108 = vmatprep.subr.mxu0 0.0
    %109 = vmatpush1.msra.mxu0 0.0
    %110 = vmatprep.subr.mxu0 0.0
    %111 = vmatpush1.msra.mxu0 0.0
    %112 = vmatprep.subr.mxu0 0.0
    %113 = vmatpush1.msra.mxu0 0.0
    %114 = vmatprep.subr.mxu0 0.0
    %115 = vmatpush1.msra.mxu0 0.0
    %116 = vmatprep.subr.mxu0 0.0
    %117 = vmatpush1.msra.mxu0 0.0
    %118 = vmatprep.subr.mxu0 0.0
    %119 = vmatpush1.msra.mxu0 0.0
    %120 = vmatprep.subr.mxu0 0.0
    %121 = vmatpush1.msra.mxu0 0.0
    %122 = vmatprep.subr.mxu0 0.0
    %123 = vmatpush1.msra.mxu0 0.0
    %124 = vmatprep.subr.mxu0 0.0
    %125 = vmatpush1.msra.mxu0 0.0
    %126 = vmatprep.subr.mxu0 0.0
    %127 = vmatpush1.msra.mxu0 0.0
    %128 = vmatprep.subr.mxu0 0.0
    %129 = vmatpush1.msra.mxu0 0.0
    %130 = vmatprep.subr.mxu0 0.0
    %131 = vmatpush1.msra.mxu0 0.0
    %132 = vmatprep.subr.mxu0 0.0
    %133 = vmatpush1.msra.mxu0 0.0
    %134 = vmatprep.subr.mxu0 0.0
    %135 = vmatpush1.msra.mxu0 0.0
    %136 = vmatprep.subr.mxu0 0.0
    %137 = vmatpush1.msra.mxu0 0.0
    %138 = vmatprep.subr.mxu0 0.0
    %139 = vmatpush1.msra.mxu0 0.0
    %140 = vmatprep.subr.mxu0 0.0
    %141 = vmatpush1.msra.mxu0 0.0
    %142 = vmatprep.mubr.f32.mxu0 0.0
    %143 = vmatmul.mubr.f32.gmra.mrb[0].mxu0 %v67
    %v144 = vpop.f32.mrb[0].mxu0
    %v145 = vadd.f32 %v48, %v144
    %v146 = vpop.f32.mrb[0].mxu0
    %147 = vmatprep.mubr.f32.mxu0 0.0
    %148 = vmatmul.mubr.f32.gmra.mrb[0].mxu0 %v70
    %v149 = vpop.f32.mrb[0].mxu0
    %v150 = vadd.f32 %v53, %v149
    %v151 = vpop.f32.mrb[0].mxu0
    %152 = vmatprep.mubr.f32.mxu0 0.0
    %153 = vmatmul.mubr.f32.gmra.mrb[0].mxu0 %v73
    %v154 = vpop.f32.mrb[0].mxu0
    %v155 = vadd.f32 %v58, %v154
    %v156 = vpop.f32.mrb[0].mxu0
    %157 = vmatprep.mubr.f32.mxu0 0.0
    %158 = vmatmul.mubr.f32.gmra.mrb[0].mxu0 %v76
    %v159 = vpop.f32.mrb[0].mxu0
    %v160 = vadd.f32 %v63, %v159
    %v161 = vpop.f32.mrb[0].mxu0
    %162 = vdwg.mxu0
    %v163 = vmax.f32 %v145, 0.0
    %v164 = vmax.f32 %v150, 0.0
    %v165 = vmax.f32 %v155, 0.0
    %v166 = vmax.f32 %v160, 0.0
    %v167 = vld [vmem:[%s4] sm:$0xff]
    %v168 = vld [vmem:[%s4 + $0x8] sm:$0xff]
    %v169 = vld [vmem:[%s4 + $0x10] sm:$0xff]
    %v170 = vld [vmem:[%s4 + $0x18] sm:$0xff]
    %v171 = vld [vmem:[%s5] sm:$0xff]
    %v172 = vld [vmem:[%s5 + $0x8] sm:$0xff]
    %v173 = vld [vmem:[%s5 + $0x10] sm:$0xff]
    %v174 = vld [vmem:[%s5 + $0x18] sm:$0xff]
    %v175 = vld [vmem:[%s1] sm:$0xf]
    %vm176 = vcmask 31744
    %v178 = vsel %vm176, %v171, 0
    %v181 = vsel %vm176, %v172, 0
    %v184 = vsel %vm176, %v173, 0
    %v187 = vsel %vm176, %v174, 0
    %vm189 = vcmask 1043456
    %v191 = vsel %vm189, %v175, 0
    %193 = vmatprep.subr.mxu0 0.0
    %194 = vmatpush1.msra.mxu0 %v191
    %195 = vmatprep.subr.mxu0 0.0
    %196 = vmatpush1.msra.mxu0 0.0
    %197 = vmatprep.subr.mxu0 0.0
    %198 = vmatpush1.msra.mxu0 0.0
    %199 = vmatprep.subr.mxu0 0.0
    %200 = vmatpush1.msra.mxu0 0.0
    %201 = vmatprep.subr.mxu0 0.0
    %202 = vmatpush1.msra.mxu0 0.0
    %203 = vmatprep.subr.mxu0 0.0
    %204 = vmatpush1.msra.mxu0 0.0
    %205 = vmatprep.subr.mxu0 0.0
    %206 = vmatpush1.msra.mxu0 0.0
    %207 = vmatprep.subr.mxu0 0.0
    %208 = vmatpush1.msra.mxu0 0.0
    %209 = vmatprep.subr.mxu0 0.0
    %210 = vmatpush1.msra.mxu0 0.0
    %211 = vmatprep.subr.mxu0 0.0
    %212 = vmatpush1.msra.mxu0 0.0
    %213 = vmatprep.subr.mxu0 0.0
    %214 = vmatpush1.msra.mxu0 0.0
    %215 = vmatprep.subr.mxu0 0.0
    %216 = vmatpush1.msra.mxu0 0.0
    %217 = vmatprep.subr.mxu0 0.0
    %218 = vmatpush1.msra.mxu0 0.0
    %219 = vmatprep.subr.mxu0 0.0
    %220 = vmatpush1.msra.mxu0 0.0
    %221 = vmatprep.subr.mxu0 0.0
    %222 = vmatpush1.msra.mxu0 0.0
    %223 = vmatprep.subr.mxu0 0.0
    %224 = vmatpush1.msra.mxu0 0.0
    %225 = vmatprep.subr.mxu0 0.0
    %226 = vmatpush1.msra.mxu0 0.0
    %227 = vmatprep.subr.mxu0 0.0
    %228 = vmatpush1.msra.mxu0 0.0
    %229 = vmatprep.subr.mxu0 0.0
    %230 = vmatpush1.msra.mxu0 0.0
    %231 = vmatprep.subr.mxu0 0.0
    %232 = vmatpush1.msra.mxu0 0.0
    %233 = vmatprep.subr.mxu0 0.0
    %234 = vmatpush1.msra.mxu0 0.0
    %235 = vmatprep.subr.mxu0 0.0
    %236 = vmatpush1.msra.mxu0 0.0
    %237 = vmatprep.subr.mxu0 0.0
    %238 = vmatpush1.msra.mxu0 0.0
    %239 = vmatprep.subr.mxu0 0.0
    %240 = vmatpush1.msra.mxu0 0.0
    %241 = vmatprep.subr.mxu0 0.0
    %242 = vmatpush1.msra.mxu0 0.0
    %243 = vmatprep.subr.mxu0 0.0
    %244 = vmatpush1.msra.mxu0 0.0
    %245 = vmatprep.subr.mxu0 0.0
    %246 = vmatpush1.msra.mxu0 0.0
    %247 = vmatprep.subr.mxu0 0.0
    %248 = vmatpush1.msra.mxu0 0.0
    %249 = vmatprep.subr.mxu0 0.0
    %250 = vmatpush1.msra.mxu0 0.0
    %251 = vmatprep.subr.mxu0 0.0
    %252 = vmatpush1.msra.mxu0 0.0
    %253 = vmatprep.subr.mxu0 0.0
    %254 = vmatpush1.msra.mxu0 0.0
    %255 = vmatprep.subr.mxu0 0.0
    %256 = vmatpush1.msra.mxu0 0.0
    %257 = vmatprep.mubr.f32.mxu0 0.0
    %258 = vmatmul.mubr.f32.gmra.mrb[0].mxu0 %v178
    %v259 = vpop.f32.mrb[0].mxu0
    %v260 = vadd.f32 0.0, %v259
    %v261 = vpop.f32.mrb[0].mxu0
    %262 = vmatprep.mubr.f32.mxu0 0.0
    %263 = vmatmul.mubr.f32.gmra.mrb[0].mxu0 %v181
    %v264 = vpop.f32.mrb[0].mxu0
    %v265 = vadd.f32 0.0, %v264
    %v266 = vpop.f32.mrb[0].mxu0
    %267 = vmatprep.mubr.f32.mxu0 0.0
    %268 = vmatmul.mubr.f32.gmra.mrb[0].mxu0 %v184
    %v269 = vpop.f32.mrb[0].mxu0
    %v270 = vadd.f32 0.0, %v269
    %v271 = vpop.f32.mrb[0].mxu0
    %272 = vmatprep.mubr.f32.mxu0 0.0
    %273 = vmatmul.mubr.f32.gmra.mrb[0].mxu0 %v187
    %v274 = vpop.f32.mrb[0].mxu0
    %v275 = vadd.f32 0.0, %v274
    %v276 = vpop.f32.mrb[0].mxu0
    %277 = vdwg.mxu0
    %vm278 = vcmask 261120
    %v280 = vsel %vm278, %v167, 0
    %v283 = vsel %vm278, %v168, 0
    %v286 = vsel %vm278, %v169, 0
    %v289 = vsel %vm278, %v170, 0
    %291 = vmatprep.subr.mxu0 0.0
    %292 = vmatpush1.msra.mxu0 %v163
    %293 = vmatprep.subr.mxu0 0.0
    %294 = vmatpush1.msra.mxu0 %v164
    %295 = vmatprep.subr.mxu0 0.0
    %296 = vmatpush1.msra.mxu0 %v165
    %297 = vmatprep.subr.mxu0 0.0
    %298 = vmatpush1.msra.mxu0 %v166
    %299 = vmatprep.subr.mxu0 0.0
    %300 = vmatpush1.msra.mxu0 0.0
    %301 = vmatprep.subr.mxu0 0.0
    %302 = vmatpush1.msra.mxu0 0.0
    %303 = vmatprep.subr.mxu0 0.0
    %304 = vmatpush1.msra.mxu0 0.0
    %305 = vmatprep.subr.mxu0 0.0
    %306 = vmatpush1.msra.mxu0 0.0
    %307 = vmatprep.subr.mxu0 0.0
    %308 = vmatpush1.msra.mxu0 0.0
    %309 = vmatprep.subr.mxu0 0.0
    %310 = vmatpush1.msra.mxu0 0.0
    %311 = vmatprep.subr.mxu0 0.0
    %312 = vmatpush1.msra.mxu0 0.0
    %313 = vmatprep.subr.mxu0 0.0
    %314 = vmatpush1.msra.mxu0 0.0
    %315 = vmatprep.subr.mxu0 0.0
    %316 = vmatpush1.msra.mxu0 0.0
    %317 = vmatprep.subr.mxu0 0.0
    %318 = vmatpush1.msra.mxu0 0.0
    %319 = vmatprep.subr.mxu0 0.0
    %320 = vmatpush1.msra.mxu0 0.0
    %321 = vmatprep.subr.mxu0 0.0
    %322 = vmatpush1.msra.mxu0 0.0
    %323 = vmatprep.subr.mxu0 0.0
    %324 = vmatpush1.msra.mxu0 0.0
    %325 = vmatprep.subr.mxu0 0.0
    %326 = vmatpush1.msra.mxu0 0.0
    %327 = vmatprep.subr.mxu0 0.0
    %328 = vmatpush1.msra.mxu0 0.0
    %329 = vmatprep.subr.mxu0 0.0
    %330 = vmatpush1.msra.mxu0 0.0
    %331 = vmatprep.subr.mxu0 0.0
    %332 = vmatpush1.msra.mxu0 0.0
    %333 = vmatprep.subr.mxu0 0.0
    %334 = vmatpush1.msra.mxu0 0.0
    %335 = vmatprep.subr.mxu0 0.0
    %336 = vmatpush1.msra.mxu0 0.0
    %337 = vmatprep.subr.mxu0 0.0
    %338 = vmatpush1.msra.mxu0 0.0
    %339 = vmatprep.subr.mxu0 0.0
    %340 = vmatpush1.msra.mxu0 0.0
    %341 = vmatprep.subr.mxu0 0.0
    %342 = vmatpush1.msra.mxu0 0.0
    %343 = vmatprep.subr.mxu0 0.0
    %344 = vmatpush1.msra.mxu0 0.0
    %345 = vmatprep.subr.mxu0 0.0
    %346 = vmatpush1.msra.mxu0 0.0
    %347 = vmatprep.subr.mxu0 0.0
    %348 = vmatpush1.msra.mxu0 0.0
    %349 = vmatprep.subr.mxu0 0.0
    %350 = vmatpush1.msra.mxu0 0.0
    %351 = vmatprep.subr.mxu0 0.0
    %352 = vmatpush1.msra.mxu0 0.0
    %353 = vmatprep.subr.mxu0 0.0
    %354 = vmatpush1.msra.mxu0 0.0
    %355 = vmatprep.mubr.f32.mxu0 0.0
    %356 = vmatmul.mubr.f32.gmra.mrb[0].mxu0 %v280
    %v357 = vpop.f32.mrb[0].mxu0
    %v358 = vadd.f32 %v260, %v357
    %v359 = vpop.f32.mrb[0].mxu0
    %360 = vmatprep.mubr.f32.mxu0 0.0
    %361 = vmatmul.mubr.f32.gmra.mrb[0].mxu0 %v283
    %v362 = vpop.f32.mrb[0].mxu0
    %v363 = vadd.f32 %v265, %v362
    %v364 = vpop.f32.mrb[0].mxu0
    %365 = vmatprep.mubr.f32.mxu0 0.0
    %366 = vmatmul.mubr.f32.gmra.mrb[0].mxu0 %v286
    %v367 = vpop.f32.mrb[0].mxu0
    %v368 = vadd.f32 %v270, %v367
    %v369 = vpop.f32.mrb[0].mxu0
    %370 = vmatprep.mubr.f32.mxu0 0.0
    %371 = vmatmul.mubr.f32.gmra.mrb[0].mxu0 %v289
    %v372 = vpop.f32.mrb[0].mxu0
    %v373 = vadd.f32 %v275, %v372
    %v374 = vpop.f32.mrb[0].mxu0
    %375 = vdwg.mxu0
    %v376 = vld [vmem:[%s6] sm:$0xff]
    %v377 = vld [vmem:[%s6 + $0x8] sm:$0xff]
    %v378 = vld [vmem:[%s6 + $0x10] sm:$0xff]
    %v379 = vld [vmem:[%s6 + $0x18] sm:$0xff]
    %381 = vset.pattern.permute.xlu0 0
    %382 = vperm.xlu0 %381, %v376
    %v383 = vpop.permute.xlu0 %382
    %386 = vset.pattern.permute.xlu0 0
    %387 = vperm.xlu0 %386, %v377
    %v388 = vpop.permute.xlu0 %387
    %391 = vset.pattern.permute.xlu0 0
    %392 = vperm.xlu0 %391, %v378
    %v393 = vpop.permute.xlu0 %392
    %396 = vset.pattern.permute.xlu0 0
    %397 = vperm.xlu0 %396, %v379
    %v398 = vpop.permute.xlu0 %397
    %v400 = vadd.f32 %v358, %v383
    %v401 = vadd.f32 %v363, %v388
    %v402 = vadd.f32 %v368, %v393
    %v403 = vadd.f32 %v373, %v398
    %v404 = vmax.f32 %v400, 0.0
    %v405 = vmax.f32 %v401, 0.0
    %v406 = vmax.f32 %v402, 0.0
    %v407 = vmax.f32 %v403, 0.0
    %v408 = vld [vmem:[%s7] sm:$0x1]
    %v409 = vld [vmem:[#allocation2] sm:$0x1]
    %411 = vset.pattern.permute.xlu0 0
    %412 = vperm.xlu0 %411, %v409
    %v413 = vpop.permute.xlu0 %412
    %v415 = vlaneseq
    %v416 = vshrl.u32 %v415, 7
    %v417 = vsub.s32 0, %v416
    %v418 = vrot.slane %v413, %v417
    %v420 = vsel %vm278, %v408, 0
    %422 = vmatprep.subr.mxu0 0.0
    %423 = vmatpush1.msra.mxu0 %v404
    %424 = vmatprep.subr.mxu0 0.0
    %425 = vmatpush1.msra.mxu0 %v405
    %426 = vmatprep.subr.mxu0 0.0
    %427 = vmatpush1.msra.mxu0 %v406
    %428 = vmatprep.subr.mxu0 0.0
    %429 = vmatpush1.msra.mxu0 %v407
    %430 = vmatprep.subr.mxu0 0.0
    %431 = vmatpush1.msra.mxu0 0.0
    %432 = vmatprep.subr.mxu0 0.0
    %433 = vmatpush1.msra.mxu0 0.0
    %434 = vmatprep.subr.mxu0 0.0
    %435 = vmatpush1.msra.mxu0 0.0
    %436 = vmatprep.subr.mxu0 0.0
    %437 = vmatpush1.msra.mxu0 0.0
    %438 = vmatprep.subr.mxu0 0.0
    %439 = vmatpush1.msra.mxu0 0.0
    %440 = vmatprep.subr.mxu0 0.0
    %441 = vmatpush1.msra.mxu0 0.0
    %442 = vmatprep.subr.mxu0 0.0
    %443 = vmatpush1.msra.mxu0 0.0
    %444 = vmatprep.subr.mxu0 0.0
    %445 = vmatpush1.msra.mxu0 0.0
    %446 = vmatprep.subr.mxu0 0.0
    %447 = vmatpush1.msra.mxu0 0.0
    %448 = vmatprep.subr.mxu0 0.0
    %449 = vmatpush1.msra.mxu0 0.0
    %450 = vmatprep.subr.mxu0 0.0
    %451 = vmatpush1.msra.mxu0 0.0
    %452 = vmatprep.subr.mxu0 0.0
    %453 = vmatpush1.msra.mxu0 0.0
    %454 = vmatprep.subr.mxu0 0.0
    %455 = vmatpush1.msra.mxu0 0.0
    %456 = vmatprep.subr.mxu0 0.0
    %457 = vmatpush1.msra.mxu0 0.0
    %458 = vmatprep.subr.mxu0 0.0
    %459 = vmatpush1.msra.mxu0 0.0
    %460 = vmatprep.subr.mxu0 0.0
    %461 = vmatpush1.msra.mxu0 0.0
    %462 = vmatprep.subr.mxu0 0.0
    %463 = vmatpush1.msra.mxu0 0.0
    %464 = vmatprep.subr.mxu0 0.0
    %465 = vmatpush1.msra.mxu0 0.0
    %466 = vmatprep.subr.mxu0 0.0
    %467 = vmatpush1.msra.mxu0 0.0
    %468 = vmatprep.subr.mxu0 0.0
    %469 = vmatpush1.msra.mxu0 0.0
    %470 = vmatprep.subr.mxu0 0.0
    %471 = vmatpush1.msra.mxu0 0.0
    %472 = vmatprep.subr.mxu0 0.0
    %473 = vmatpush1.msra.mxu0 0.0
    %474 = vmatprep.subr.mxu0 0.0
    %475 = vmatpush1.msra.mxu0 0.0
    %476 = vmatprep.subr.mxu0 0.0
    %477 = vmatpush1.msra.mxu0 0.0
    %478 = vmatprep.subr.mxu0 0.0
    %479 = vmatpush1.msra.mxu0 0.0
    %480 = vmatprep.subr.mxu0 0.0
    %481 = vmatpush1.msra.mxu0 0.0
    %482 = vmatprep.subr.mxu0 0.0
    %483 = vmatpush1.msra.mxu0 0.0
    %484 = vmatprep.subr.mxu0 0.0
    %485 = vmatpush1.msra.mxu0 0.0
    %486 = vmatprep.mubr.f32.mxu0 0.0
    %487 = vmatmul.mubr.f32.gmra.mrb[0].mxu0 %v420
    %v488 = vpop.f32.mrb[0].mxu0
    %v489 = vadd.f32 %v418, %v488
    %v490 = vpop.f32.mrb[0].mxu0
    %491 = vdwg.mxu0
    %492 = vst [vmem:[#allocation3] sm:$0x1] %v489
    // Predicated region
    $region38: #{tpu_custom_call.1} parent=1 // pred_check
      _
    $region39: #{tpu_custom_call.1} parent=1 // pred_check_branch
      %494 = sbr.rel (0) target = $region41
    $region40: #{tpu_custom_call.1} parent=1 // pred_region
      %s496 = ssub.s32 16, 16
      %497 = vsyncadd [#allocation4], %s496
      %s499 = sshll.u32 [#allocation3], 4
      %s500 = int_to_ptr.vmem [resolvable:$true] %s499
      %502 = dma.vmem_to_hbm [thread:$0]  %s500, 16, %s9, [#allocation4]
    $region41: #{tpu_custom_call.1} parent=1 // pred_fallthru
      _
    // Predicated region
    $region42: #{tpu_custom_call.1} parent=1 // pred_check
      _
    $region43: #{tpu_custom_call.1} parent=1 // pred_check_branch
      %504 = sbr.rel (0) target = $region45
    $region44: #{tpu_custom_call.1} parent=1 // pred_region
      %505 = dma.done [#allocation4], 16
    $region45: #{tpu_custom_call.1} parent=1 // pred_fallthru
      _
    %506 = vsyncpa [#allocation4], 1

</llo_original>
